<compile_context>
chip_gen: v7x
topology: tpu7x:2x2x1
jax: 0.10.0
libtpu: 0.0.40
codegen_flags: <defaults>
</compile_context>

<pallas_src>
import jax
import jax.numpy as jnp
from jax.experimental import pallas as pl
from jax.experimental.pallas import tpu as pltpu

_LN2 = 0.6931471805599453
_LANE = 128
_SUBLANE = 8
# ~2 MiB f32 per block: >=85% of HBM roofline per measured tile-size scaling,
# and in+out double-buffering (~8 MiB) fits every generation's VMEM budget.
_TARGET_BLOCK_ELEMS = 512 * 1024


def _softplus_kernel(x_ref, o_ref):
    # Upcast to f32 for exp/log1p (v5e has no bf16 VPU/EUP); I/O stays native.
    x = x_ref[...].astype(jnp.float32)
    z = x + x
    # Numerically stable softplus: max(z, 0) + log1p(exp(-|z|))
    sp = jnp.maximum(z, 0.0) + jnp.log1p(jnp.exp(-jnp.abs(z)))
    o_ref[...] = ((sp - _LN2) * 0.5).astype(o_ref.dtype)


def soft_shifted_relu(x):
    """(softplus(2x) - ln2)/2, elementwise, via a Pallas TPU kernel."""
    orig_shape = x.shape
    if not jnp.issubdtype(x.dtype, jnp.floating):
        # PyTorch softplus requires float input; promote non-float inputs.
        x = x.astype(jnp.float32)
    dtype = x.dtype
    n = x.size
    if n == 0:
        return jnp.zeros(orig_shape, dtype)

    # Pick the widest lane-dense column count that divides n, so the reshape
    # is a free (contiguous) view and no padding copy is needed.
    ncols = None
    for cand in (2048, 1024, 512, 256, _LANE):
        if n % cand == 0:
            ncols = cand
            break

    if ncols is None:
        # Rare ragged fallback: pad the flat array up to a 128-lane multiple.
        ncols = _LANE
        nrows = pl.cdiv(n, ncols)
        flat = jnp.pad(x.reshape(-1), (0, nrows * ncols - n))
        x2d = flat.reshape(nrows, ncols)
        needs_slice = True
    else:
        nrows = n // ncols
        x2d = x.reshape(nrows, ncols)
        needs_slice = False

    # Row tile targeting ~2 MiB (f32-equivalent) blocks; multiple of 8
    # sublanes.  Never collapses to tiny tiles: a ragged last grid step is
    # handled by Pallas' partial-block masking.
    tile_rows = max(_SUBLANE,
                    (_TARGET_BLOCK_ELEMS // ncols) // _SUBLANE * _SUBLANE)
    if tile_rows >= nrows:
        tile_rows = nrows  # single full-extent block (always a legal shape)
    grid = (pl.cdiv(nrows, tile_rows),)

    out2d = pl.pallas_call(
        _softplus_kernel,
        out_shape=jax.ShapeDtypeStruct((nrows, ncols), dtype),
        grid=grid,
        in_specs=[pl.BlockSpec((tile_rows, ncols), lambda i: (i, 0))],
        out_specs=pl.BlockSpec((tile_rows, ncols), lambda i: (i, 0)),
        compiler_params=pltpu.CompilerParams(
            dimension_semantics=("parallel",)),
    )(x2d)

    if needs_slice:
        return out2d.reshape(-1)[:n].reshape(orig_shape)
    return out2d.reshape(orig_shape)


if __name__ == "__main__":
    def ref_fn(x):
        z = 2.0 * x.astype(jnp.float32)
        sp = jnp.maximum(z, 0.0) + jnp.log1p(jnp.exp(-jnp.abs(z)))
        return ((sp - _LN2) / 2.0).astype(x.dtype)

    # Primary case matching the PyTorch module's NCHW usage.
    x = jax.random.normal(jax.random.PRNGKey(0), (2, 4, 16, 16),
                          dtype=jnp.float32)
    y = soft_shifted_relu(x)
    jax.block_until_ready(y)
    assert y.shape == x.shape and y.dtype == x.dtype
    assert jnp.allclose(y, ref_fn(x), atol=1e-6, rtol=1e-6)

    # Ragged-size fallback path.
    x2 = jax.random.normal(jax.random.PRNGKey(1), (3, 5, 7), dtype=jnp.float32)
    y2 = soft_shifted_relu(x2)
    jax.block_until_ready(y2)
    assert y2.shape == x2.shape
    assert jnp.allclose(y2, ref_fn(x2), atol=1e-6, rtol=1e-6)

    # bf16 I/O with in-kernel f32 compute (halves HBM bytes, v5e-safe math).
    x3 = jax.random.normal(jax.random.PRNGKey(2), (2, 4, 16, 16),
                           dtype=jnp.bfloat16)
    y3 = soft_shifted_relu(x3)
    jax.block_until_ready(y3)
    assert y3.dtype == jnp.bfloat16 and y3.shape == x3.shape
    assert jnp.allclose(y3.astype(jnp.float32),
                        ref_fn(x3).astype(jnp.float32),
                        atol=2e-2, rtol=2e-2)

    print("KERNEL_OK")
</pallas_src>

<mosaic_0001>
module attributes {stable_mosaic.version = 11 : i64} {
  func.func @_softplus_kernel(%arg0: i32, %arg1: memref<1x2048xf32, #tpu.memory_space<vmem>>, %arg2: memref<1x2048xf32, #tpu.memory_space<vmem>>) attributes {dimension_semantics = [#tpu.dimension_semantics<parallel>], iteration_bounds = array<i64: 1>, scalar_prefetch = 0 : i64, scratch_operands = 0 : i64, tpu.core_type = #tpu.core_type<tc>, window_params = [{transform_indices = @transform_0, window_bounds = array<i64: 1, 2048>}, {transform_indices = @transform_1, window_bounds = array<i64: 1, 2048>}]} {
    %c0 = arith.constant 0 : index
    %c0_0 = arith.constant 0 : index
    %0 = vector.load %arg1[%c0, %c0_0] : memref<1x2048xf32, #tpu.memory_space<vmem>>, vector<1x2048xf32>
    %1 = arith.addf %0, %0 : vector<1x2048xf32>
    %cst = arith.constant 0.000000e+00 : f32
    %2 = vector.broadcast %cst : f32 to vector<1x2048xf32>
    %3 = arith.maximumf %1, %2 : vector<1x2048xf32>
    %4 = math.absf %1 : vector<1x2048xf32>
    %cst_1 = arith.constant 0.000000e+00 : f32
    %5 = vector.broadcast %cst_1 : f32 to vector<1x2048xf32>
    %6 = arith.subf %5, %4 : vector<1x2048xf32>
    %7 = math.exp %6 : vector<1x2048xf32>
    %8 = math.log1p %7 : vector<1x2048xf32>
    %9 = arith.addf %3, %8 : vector<1x2048xf32>
    %cst_2 = arith.constant 0.693147182 : f32
    %10 = vector.broadcast %cst_2 : f32 to vector<1x2048xf32>
    %11 = arith.subf %9, %10 : vector<1x2048xf32>
    %cst_3 = arith.constant 5.000000e-01 : f32
    %12 = vector.broadcast %cst_3 : f32 to vector<1x2048xf32>
    %13 = arith.mulf %11, %12 : vector<1x2048xf32>
    %c0_4 = arith.constant 0 : index
    %c0_5 = arith.constant 0 : index
    %14 = vector.load %arg2[%c0_4, %c0_5] : memref<1x2048xf32, #tpu.memory_space<vmem>>, vector<1x2048xf32>
    tpu.vector_store %arg2[%c0_4, %c0_5], %13 {strides = array<i32>} : memref<1x2048xf32, #tpu.memory_space<vmem>>, vector<1x2048xf32>,
    return
  }
  func.func @transform_0(%arg0: i32) -> (i32, i32) {
    %c0_i32 = arith.constant 0 : i32
    %c0_i32_0 = arith.constant 0 : i32
    return %arg0, %c0_i32 : i32, i32
  }
  func.func @transform_1(%arg0: i32) -> (i32, i32) {
    %c0_i32 = arith.constant 0 : i32
    %c0_i32_0 = arith.constant 0 : i32
    return %arg0, %c0_i32 : i32, i32
  }
}

</mosaic_0001>

<llo_original>
// kernel: tpu_custom_call.1
$region0: #{tpu_custom_call.1}
  #allocation0 [shape = 'u32[]', space=smem, size = 0x4, offset = 0x4, fixed_abs, tag = 'smem constant byte address 0x4 - core index']
  #allocation1 [shape = 'u32[144,128]{1,0:T(1,128)}', space=vmem, size = 0x12000, scoped, tag = 'internal scratch']
  %s0 = inlined_call_operand.hbm [shape: f32[1,2048], index: 0, kind: input, shape index: {}]
  %s1 = inlined_call_operand.hbm [shape: f32[1,2048], index: 1, kind: output, shape index: {}]
  %s2 = sld [smem:[#allocation0]]
  $region18: #{tpu_custom_call.1} parent=0
    _
  %s4 = ssub.s32 1, %s2
  %s5 = scalar_select 0, %s4, %s2
  $region1: #{tpu_custom_call.1} parent=0
    #allocation2 [shape = 'u8[8192]{0}', space=vmem, size = 0x2000, scoped, tag = 'input window, operand 0, single buffered']
    #allocation3 [shape = 's32[1]{0}', space=sflag, size = 0x4, scoped, tag = 'scoped memory for tpu_custom_call.1']
    #allocation4 [shape = 's32[1]{0}', space=sflag, size = 0x4, scoped, tag = 'scoped memory for tpu_custom_call.1']
    #allocation5 [shape = 'u8[8192]{0}', space=vmem, size = 0x2000, scoped, tag = 'output window, operand 0, single buffered']
    %6 = vsyncpa [#allocation3], 0
    %7 = vsyncpa [#allocation4], 0
    // Predicated region
    $region2: #{tpu_custom_call.1} parent=1 // pred_check
      _
    $region3: #{tpu_custom_call.1} parent=1 // pred_check_branch
      %9 = sbr.rel (0) target = $region5
    $region4: #{tpu_custom_call.1} parent=1 // pred_region
      %s11 = ssub.s32 256, 256
      %12 = vsyncadd [#allocation3], %s11
      %s14 = sshll.u32 [#allocation2], 4
      %s15 = int_to_ptr.vmem [resolvable:$true] %s14
      %17 = dma.hbm_to_vmem [thread:$0]  %s0, 256, %s15, [#allocation3]
    $region5: #{tpu_custom_call.1} parent=1 // pred_fallthru
      _
    // Predicated region
    $region6: #{tpu_custom_call.1} parent=1 // pred_check
      _
    $region7: #{tpu_custom_call.1} parent=1 // pred_check_branch
      %19 = sbr.rel (0) target = $region9
    $region8: #{tpu_custom_call.1} parent=1 // pred_region
      %20 = dma.done [#allocation3], 256
    $region9: #{tpu_custom_call.1} parent=1 // pred_fallthru
      _
    %v21 = vld [vmem:[#allocation2] sm:$0xff]
    %v22 = vld [vmem:[#allocation2 + $0x8] sm:$0xff]
    %v23 = vadd.f32 %v21, %v21
    %v24 = vadd.f32 %v22, %v22
    %v25 = vmax.f32 %v23, 0.0
    %v26 = vmax.f32 %v24, 0.0
    %v27 = vand.u32 2147483647, %v23
    %v28 = vand.u32 2147483647, %v24
    %v29 = vsub.f32 0.0, %v27
    %v30 = vsub.f32 0.0, %v28
    %v31 = vmul.f32 %v29, 1.442695
    %v32 = vpow.pop %v31
    %v33 = vmul.f32 %v30, 1.442695
    %v34 = vpow.pop %v33
    %v35 = vadd.f32 %v32, 1.0
    %v36 = vlog2.pop %v35
    %v37 = vmul.f32 %v36, 0.6931472
    %v38 = vmul.f32 -0.5, %v32
    %v39 = vadd.f32 %v38, 1.0
    %v40 = vmul.f32 %v39, %v32
    %v41 = vand.u32 2147483647, %v32
    %vm42 = vcmp.lt.f32.partialorder %v41, 0.0004427343
    %v43 = vsel %vm42, %v40, %v37
    %v44 = vadd.f32 %v34, 1.0
    %v45 = vlog2.pop %v44
    %v46 = vmul.f32 %v45, 0.6931472
    %v47 = vmul.f32 -0.5, %v34
    %v48 = vadd.f32 %v47, 1.0
    %v49 = vmul.f32 %v48, %v34
    %v50 = vand.u32 2147483647, %v34
    %vm51 = vcmp.lt.f32.partialorder %v50, 0.0004427343
    %v52 = vsel %vm51, %v49, %v46
    %v53 = vadd.f32 %v25, %v43
    %v54 = vadd.f32 %v26, %v52
    %v55 = vsub.f32 %v53, 0.6931472
    %v56 = vsub.f32 %v54, 0.6931472
    %v57 = vmul.f32 %v55, 0.5
    %v58 = vmul.f32 %v56, 0.5
    %59 = vst [vmem:[#allocation5] sm:$0xff] %v57
    %60 = vst [vmem:[#allocation5 + $0x8] sm:$0xff] %v58
    // Predicated region
    $region10: #{tpu_custom_call.1} parent=1 // pred_check
      _
    $region11: #{tpu_custom_call.1} parent=1 // pred_check_branch
      %62 = sbr.rel (0) target = $region13
    $region12: #{tpu_custom_call.1} parent=1 // pred_region
      %s64 = ssub.s32 256, 256
      %65 = vsyncadd [#allocation4], %s64
      %s67 = sshll.u32 [#allocation5], 4
      %s68 = int_to_ptr.vmem [resolvable:$true] %s67
      %70 = dma.vmem_to_hbm [thread:$0]  %s68, 256, %s1, [#allocation4]
    $region13: #{tpu_custom_call.1} parent=1 // pred_fallthru
      _
    // Predicated region
    $region14: #{tpu_custom_call.1} parent=1 // pred_check
      _
    $region15: #{tpu_custom_call.1} parent=1 // pred_check_branch
      %72 = sbr.rel (0) target = $region17
    $region16: #{tpu_custom_call.1} parent=1 // pred_region
      %73 = dma.done [#allocation4], 256
    $region17: #{tpu_custom_call.1} parent=1 // pred_fallthru
      _
    %74 = vsyncpa [#allocation3], 1
    %75 = vsyncpa [#allocation4], 1

</llo_original>
